<compile_context>
chip_gen: v7x
topology: tpu7x:2x2x1
jax: 0.10.0
libtpu: 0.0.40
codegen_flags: <defaults>
</compile_context>

<pallas_src>
import functools

import numpy as np
import jax
import jax.numpy as jnp
from jax import lax
from jax.experimental import pallas as pl
from jax.experimental.pallas import tpu as pltpu

EPS = 1e-12          # matches F.pairwise_distance(..., eps=1e-12)
LANES = 128
SUBLANES = 8
METRIC_TILE_L = 512  # pairs/triplets per grid step (lane axis); fits all VMEM budgets
CE_TILE_ROWS = 512   # examples per grid step (sublane axis)


def _round_up(x, m):
    return ((x + m - 1) // m) * m


# --------------------------- Pallas kernels ---------------------------------

def _metric_kernel(embT_ref, idx_ref, out_ref, *, d_real, c_margin, t_margin):
    """Fused contrastive + triplet metric kernel (one lane-tile per grid step).

    embT_ref : (Dp, Bp) f32   embeddings transposed (features on sublanes,
                              batch on the contraction/lane dim); VMEM-resident.
    idx_ref  : (8, T)  int32  rows 0/1 = pos pair, 2/3 = neg pair,
                              4/5/6 = triplet anchor/pos/neg (lane-padded w/ 0).
    out_ref  : (8, T)  f32    rows: pos_dist, neg_dist, neg_hinge, ap_dist,
                              an_dist, triplet_loss, 0, 0 (one full store).
    """
    embT = embT_ref[...].astype(jnp.float32)             # (Dp, Bp)
    idx = idx_ref[...]                                    # (8, T)
    Dp, Bp = embT.shape
    T = idx.shape[-1]

    # eps only on the real (unpadded) feature rows, matching
    # F.pairwise_distance's ||a - b + eps|| (padded feature rows stay 0).
    feat_ids = lax.broadcasted_iota(jnp.int32, (Dp, 1), 0)
    eps_col = jnp.where(feat_ids < d_real, jnp.float32(EPS), jnp.float32(0.0))

    batch_iota = lax.broadcasted_iota(jnp.int32, (Bp, T), 0)

    def onehot(r):                                        # (Bp, T) exact 0/1 selector
        return (batch_iota == idx[r:r + 1, :]).astype(jnp.float32)

    def pair_diff(sel):                                   # MXU gather-and-subtract
        return jnp.dot(embT, sel, preferred_element_type=jnp.float32) + eps_col

    def dist(diff):                                       # (1, T)
        return jnp.sqrt(jnp.sum(diff * diff, axis=0, keepdims=True))

    oh_anchor = onehot(4)
    pos_d = dist(pair_diff(onehot(0) - onehot(1)))
    neg_d = dist(pair_diff(onehot(2) - onehot(3)))
    ap_d = dist(pair_diff(oh_anchor - onehot(5)))
    an_d = dist(pair_diff(oh_anchor - onehot(6)))

    neg_l = jnp.maximum(jnp.float32(c_margin) - neg_d, 0.0)
    tri_l = jnp.maximum(ap_d - an_d + jnp.float32(t_margin), 0.0)

    zero = jnp.zeros_like(pos_d)
    out_ref[...] = jnp.concatenate(
        [pos_d, neg_d, neg_l, ap_d, an_d, tri_l, zero, zero], axis=0)


def _ce_kernel(tgt_ref, *refs):
    """Cross-entropy for N heads, natural (rows, C) layout, per-tile sums only.

    tgt_ref   : (TILE_R, 1) int32  class index per row; -1 marks padded rows.
    refs[:-1] : (TILE_R, C_h) f32  logits of each head (classes on lanes).
    refs[-1]  : (8, 128) f32       row 0, lane h = sum of per-row CE losses of
                                   head h over this tile; everything else 0.
    """
    head_refs, out_ref = refs[:-1], refs[-1]
    t = tgt_ref[...]                                      # (TILE_R, 1)
    valid = t >= 0

    row = lax.broadcasted_iota(jnp.int32, (SUBLANES, LANES), 0)
    lane = lax.broadcasted_iota(jnp.int32, (SUBLANES, LANES), 1)
    acc = jnp.zeros((SUBLANES, LANES), jnp.float32)

    # TODO(synk): for very large class counts add a second "arbitrary" grid
    # axis over C with an online (running max / running sum) logsumexp.
    for h, ref in enumerate(head_refs):
        x = ref[...].astype(jnp.float32)                  # (TILE_R, C_h)
        m = jnp.max(x, axis=-1, keepdims=True)
        lse = m + jnp.log(jnp.sum(jnp.exp(x - m), axis=-1, keepdims=True))
        cls = lax.broadcasted_iota(jnp.int32, x.shape, 1)
        picked = jnp.sum(jnp.where(cls == t, x, jnp.float32(0.0)),
                         axis=-1, keepdims=True)
        row_loss = jnp.where(valid, lse - picked, jnp.float32(0.0))  # (TILE_R, 1)
        acc = acc + jnp.where((row == 0) & (lane == h), jnp.sum(row_loss),
                              jnp.float32(0.0))
    out_ref[...] = acc


# --------------------------- pallas_call wrappers ----------------------------

def fused_metric_losses(embT, idx, *, d_real, c_margin, t_margin, tile_l):
    Dp, Bp = embT.shape
    _, Lp = idx.shape
    num_tiles = Lp // tile_l
    kernel = functools.partial(_metric_kernel, d_real=d_real,
                               c_margin=c_margin, t_margin=t_margin)
    return pl.pallas_call(
        kernel,
        out_shape=jax.ShapeDtypeStruct((8, Lp), jnp.float32),
        grid=(num_tiles,),
        in_specs=[pl.BlockSpec((Dp, Bp), lambda i: (0, 0)),       # VMEM-resident
                  pl.BlockSpec((8, tile_l), lambda i: (0, i))],
        out_specs=pl.BlockSpec((8, tile_l), lambda i: (0, i)),
        compiler_params=pltpu.CompilerParams(
            dimension_semantics=("parallel",)),
    )(embT, idx)


def ce_head_losses(logits_list, target, *, tile_rows=CE_TILE_ROWS):
    """Per-head mean cross-entropy; logits stay in natural (rows, C) layout."""
    N = int(target.shape[0])
    H = len(logits_list)
    tile_r = min(tile_rows, _round_up(N, SUBLANES))
    rows_p = _round_up(N, tile_r)
    num_tiles = rows_p // tile_r

    tgt = jnp.full((rows_p, 1), -1, jnp.int32).at[:N, 0].set(target)
    in_specs = [pl.BlockSpec((tile_r, 1), lambda i: (i, 0))]
    padded = []
    for lg in logits_list:
        C = int(lg.shape[1])
        padded.append(jnp.zeros((rows_p, C), jnp.float32)
                      .at[:N, :].set(lg.astype(jnp.float32)))
        in_specs.append(pl.BlockSpec((tile_r, C), lambda i: (i, 0)))

    out = pl.pallas_call(
        _ce_kernel,
        out_shape=jax.ShapeDtypeStruct((SUBLANES, num_tiles * LANES), jnp.float32),
        grid=(num_tiles,),
        in_specs=in_specs,
        out_specs=pl.BlockSpec((SUBLANES, LANES), lambda i: (0, i)),
        compiler_params=pltpu.CompilerParams(
            dimension_semantics=("parallel",)),
    )(tgt, *padded)

    head_sums = out[0, :].reshape(num_tiles, LANES).sum(axis=0)   # (LANES,)
    return [head_sums[h] / N for h in range(H)]


# --------------------------- MultiheadLoss forward ---------------------------

def multihead_loss(outputs, target, is_front, *, n_pilltypes, contrastive_margin,
                   triplet_margin, weights, pos_pairs, neg_pairs, triplets,
                   use_side_labels=True):
    emb = outputs['emb'].astype(jnp.float32)
    B, D = emb.shape
    losses = {}
    weighted = jnp.zeros((1,), jnp.float32)

    if not use_side_labels:
        is_front = None

    do_contrastive = weights['contrastive'] > 0.0
    do_triplet = weights['triplet'] > 0.0

    if do_contrastive or do_triplet:
        P = int(pos_pairs.shape[0])
        Nn = int(neg_pairs.shape[0])
        T = int(triplets.shape[0])
        n_items = max(P, Nn, T, 1)
        tile_l = min(METRIC_TILE_L, _round_up(n_items, LANES))
        Lp = _round_up(n_items, tile_l)
        Bp = _round_up(B, LANES)        # contraction dim of the one-hot matmul
        Dp = _round_up(D, SUBLANES)     # sublane axis: pad to 8, not 128

        # One small transposed/padded copy of emb and one int32 index slab; the
        # gathers happen inside the kernel via MXU one-hot matmuls.
        embT = jnp.zeros((Dp, Bp), jnp.float32).at[:D, :B].set(emb.T)
        idx = jnp.zeros((8, Lp), jnp.int32)
        idx = idx.at[0, :P].set(pos_pairs[:, 0].astype(jnp.int32))
        idx = idx.at[1, :P].set(pos_pairs[:, 1].astype(jnp.int32))
        idx = idx.at[2, :Nn].set(neg_pairs[:, 0].astype(jnp.int32))
        idx = idx.at[3, :Nn].set(neg_pairs[:, 1].astype(jnp.int32))
        idx = idx.at[4, :T].set(triplets[:, 0].astype(jnp.int32))
        idx = idx.at[5, :T].set(triplets[:, 1].astype(jnp.int32))
        idx = idx.at[6, :T].set(triplets[:, 2].astype(jnp.int32))

        metric = fused_metric_losses(embT, idx, d_real=D,
                                     c_margin=contrastive_margin,
                                     t_margin=triplet_margin, tile_l=tile_l)

        if do_contrastive:
            pos_d = metric[0, :P]
            neg_l = metric[2, :Nn]          # relu(margin - dist), as in torch
            contrastive = jnp.concatenate([pos_d, neg_l], axis=0).mean()
            losses['contrastive'] = contrastive
            losses['contrastive_pos_distances'] = pos_d
            losses['contrastive_neg_distances'] = neg_l
            losses['contrastive_distances'] = jnp.concatenate([pos_d, neg_l], axis=0)
            losses['contrastive_targets'] = jnp.concatenate(
                [jnp.ones((P,), jnp.float32), jnp.zeros((Nn,), jnp.float32)], axis=0)
            all_pairs = jnp.concatenate([pos_pairs, neg_pairs], axis=0)
            # single gather, only because the module returns these embeddings
            losses['embeddings'] = (jnp.take(emb, all_pairs[:, 0], axis=0),
                                    jnp.take(emb, all_pairs[:, 1], axis=0))
            weighted = weighted + contrastive * weights['contrastive']

        if do_triplet:
            ap = metric[3, :T]
            an = metric[4, :T]
            tri_l = metric[5, :T]
            triplet = tri_l.mean()
            losses['triplet'] = triplet
            losses['triplet_pos_distances'] = ap
            losses['triplet_neg_distances'] = an
            losses['triplet_distances'] = jnp.concatenate([ap, an], axis=0)
            losses['triplet_targets'] = jnp.concatenate(
                [jnp.ones((T,), jnp.float32), jnp.zeros((T,), jnp.float32)], axis=0)
            weighted = weighted + triplet * weights['triplet']

    losses['metric_loss'] = weighted

    # ---- side-label target adjustment ----
    if is_front is not None:
        target = jnp.where(is_front.astype(bool), target, target + n_pilltypes)
    target = target.astype(jnp.int32)

    heads = []
    if weights['ce'] > 0.0:
        heads.append(('ce', outputs['logits']))
    if weights['arcface'] > 0.0:
        heads.append(('arcface', outputs['arcface_logits']))

    # TODO(synk): focal loss depends on an external `focal_loss` module; the
    # default weight is 0.0 so it is not implemented here.

    if heads:
        head_losses = ce_head_losses([h[1] for h in heads], target)
        for (name, _), hl in zip(heads, head_losses):
            losses[name] = hl
            weighted = weighted + hl * weights[name]

    losses['loss'] = weighted
    return losses


# --------------------------- pure-JAX reference ------------------------------

def _ref_losses(emb, logits, arcface_logits, target, is_front, n_pilltypes,
                c_margin, t_margin, pos_pairs, neg_pairs, triplets, weights):
    def pdist(a, b):
        d = a - b + EPS
        return jnp.sqrt(jnp.sum(d * d, axis=-1))

    pos_d = pdist(emb[pos_pairs[:, 0]], emb[pos_pairs[:, 1]])
    neg_d = pdist(emb[neg_pairs[:, 0]], emb[neg_pairs[:, 1]])
    neg_l = jnp.maximum(c_margin - neg_d, 0.0)
    contrastive = jnp.concatenate([pos_d, neg_l]).mean()

    ap = pdist(emb[triplets[:, 0]], emb[triplets[:, 1]])
    an = pdist(emb[triplets[:, 0]], emb[triplets[:, 2]])
    triplet = jnp.maximum(ap - an + t_margin, 0.0).mean()

    tgt = jnp.where(is_front.astype(bool), target, target + n_pilltypes)

    def ce(lg):
        ls = jax.nn.log_softmax(lg.astype(jnp.float32), axis=-1)
        return -jnp.take_along_axis(ls, tgt[:, None], axis=1)[:, 0].mean()

    ce_l = ce(logits)
    arc_l = ce(arcface_logits)
    total = (contrastive * weights['contrastive'] + triplet * weights['triplet']
             + ce_l * weights['ce'] + arc_l * weights['arcface'])
    return {'contrastive': contrastive, 'triplet': triplet, 'ce': ce_l,
            'arcface': arc_l, 'loss': total}


# --------------------------- main --------------------------------------------

if __name__ == "__main__":
    B, D = 8, 32
    n_pilltypes = 4
    C = 2 * n_pilltypes            # front/back classes
    contrastive_margin = 1.0
    triplet_margin = 0.5
    weights = {'ce': 1.0, 'arcface': 1.0, 'contrastive': 1.0,
               'triplet': 1.0, 'focal': 0.0}

    key = jax.random.PRNGKey(0)
    k1, k2, k3 = jax.random.split(key, 3)
    emb = jax.random.normal(k1, (B, D), jnp.float32)
    logits = jax.random.normal(k2, (B, C), jnp.float32)
    arcface_logits = jax.random.normal(k3, (B, C), jnp.float32)
    target = jnp.array([0, 1, 2, 3, 0, 1, 2, 3], jnp.int32)
    is_front = jnp.array([1, 1, 1, 1, 0, 0, 0, 0], jnp.int32)

    # TODO(synk): the pair/triplet selector objects are external and produce
    # data-dependent (dynamic-shape) index sets; here we build deterministic
    # all-positive / all-negative pairs and all triplets on the host.
    tnp = np.asarray(target)
    pos, neg, tri = [], [], []
    for i in range(B):
        for j in range(i + 1, B):
            (pos if tnp[i] == tnp[j] else neg).append((i, j))
    for i in range(B):
        for j in range(B):
            if j != i and tnp[j] == tnp[i]:
                for k in range(B):
                    if tnp[k] != tnp[i]:
                        tri.append((i, j, k))
    pos_pairs = jnp.asarray(np.array(pos, np.int32))
    neg_pairs = jnp.asarray(np.array(neg, np.int32))
    triplets = jnp.asarray(np.array(tri, np.int32))

    outputs = {'emb': emb, 'logits': logits, 'arcface_logits': arcface_logits}
    losses = multihead_loss(outputs, target, is_front,
                            n_pilltypes=n_pilltypes,
                            contrastive_margin=contrastive_margin,
                            triplet_margin=triplet_margin,
                            weights=weights,
                            pos_pairs=pos_pairs, neg_pairs=neg_pairs,
                            triplets=triplets)
    jax.block_until_ready(losses)

    ref = _ref_losses(emb, logits, arcface_logits, target, is_front, n_pilltypes,
                      contrastive_margin, triplet_margin,
                      pos_pairs, neg_pairs, triplets, weights)
    for name in ('contrastive', 'triplet', 'ce', 'arcface'):
        assert np.allclose(np.asarray(losses[name]), np.asarray(ref[name]),
                           rtol=1e-5, atol=1e-5), name
    assert np.allclose(np.asarray(losses['loss'])[0], np.asarray(ref['loss']),
                       rtol=1e-5, atol=1e-5)

    print("KERNEL_OK")
</pallas_src>

<mosaic_0001>
module attributes {stable_mosaic.version = 11 : i64} {
  func.func @_metric_kernel(%arg0: i32, %arg1: memref<32x128xf32, #tpu.memory_space<vmem>>, %arg2: memref<8x128xi32, #tpu.memory_space<vmem>>, %arg3: memref<8x128xf32, #tpu.memory_space<vmem>>) attributes {dimension_semantics = [#tpu.dimension_semantics<parallel>], iteration_bounds = array<i64: 1>, scalar_prefetch = 0 : i64, scratch_operands = 0 : i64, tpu.core_type = #tpu.core_type<tc>, window_params = [{pipeline_mode = #tpu.pipeline_mode<synchronous>, transform_indices = @transform_0, window_bounds = array<i64: 32, 128>}, {transform_indices = @transform_1, window_bounds = array<i64: 8, 128>}, {transform_indices = @transform_2, window_bounds = array<i64: 8, 128>}]} {
    %c0 = arith.constant 0 : index
    %c0_0 = arith.constant 0 : index
    %0 = vector.load %arg1[%c0, %c0_0] : memref<32x128xf32, #tpu.memory_space<vmem>>, vector<32x128xf32>
    %c0_1 = arith.constant 0 : index
    %c0_2 = arith.constant 0 : index
    %1 = vector.load %arg2[%c0_1, %c0_2] : memref<8x128xi32, #tpu.memory_space<vmem>>, vector<8x128xi32>
    %2 = tpu.iota {dimensions = array<i32: 0>} : vector<32x1xi32>
    %c32_i32 = arith.constant 32 : i32
    %3 = vector.broadcast %c32_i32 : i32 to vector<32x1xi32>
    %4 = arith.cmpi slt, %2, %3 : vector<32x1xi32>
    %cst = arith.constant 9.99999996E-13 : f32
    %cst_3 = arith.constant 0.000000e+00 : f32
    %5 = vector.broadcast %cst : f32 to vector<32x1xf32>
    %6 = vector.broadcast %cst_3 : f32 to vector<32x1xf32>
    %7 = arith.select %4, %5, %6 : vector<32x1xi1>, vector<32x1xf32>
    %8 = tpu.iota {dimensions = array<i32: 0>} : vector<128x128xi32>
    %9 = vector.extract_strided_slice %1 {offsets = [4, 0], sizes = [1, 128], strides = [1, 1]} : vector<8x128xi32> to vector<1x128xi32>
    %10 = vector.broadcast %9 : vector<1x128xi32> to vector<128x128xi32>
    %11 = arith.cmpi eq, %8, %10 : vector<128x128xi32>
    %12 = arith.extui %11 : vector<128x128xi1> to vector<128x128xi32>
    %13 = arith.sitofp %12 : vector<128x128xi32> to vector<128x128xf32>
    %14 = vector.extract_strided_slice %1 {offsets = [0, 0], sizes = [1, 128], strides = [1, 1]} : vector<8x128xi32> to vector<1x128xi32>
    %15 = vector.broadcast %14 : vector<1x128xi32> to vector<128x128xi32>
    %16 = arith.cmpi eq, %8, %15 : vector<128x128xi32>
    %17 = arith.extui %16 : vector<128x128xi1> to vector<128x128xi32>
    %18 = arith.sitofp %17 : vector<128x128xi32> to vector<128x128xf32>
    %19 = vector.extract_strided_slice %1 {offsets = [1, 0], sizes = [1, 128], strides = [1, 1]} : vector<8x128xi32> to vector<1x128xi32>
    %20 = vector.broadcast %19 : vector<1x128xi32> to vector<128x128xi32>
    %21 = arith.cmpi eq, %8, %20 : vector<128x128xi32>
    %22 = arith.extui %21 : vector<128x128xi1> to vector<128x128xi32>
    %23 = arith.sitofp %22 : vector<128x128xi32> to vector<128x128xf32>
    %24 = arith.subf %18, %23 : vector<128x128xf32>
    %cst_4 = arith.constant dense<0.000000e+00> : vector<32x128xf32>
    %25 = tpu.matmul %0, %24, %cst_4 {dimension_numbers = #tpu.dot_dimension_numbers<[1], [0], [0], [1], [0, 0, 1, 1], [], []>} : vector<32x128xf32>, vector<128x128xf32>, vector<32x128xf32> -> vector<32x128xf32>
    %26 = vector.broadcast %7 : vector<32x1xf32> to vector<32x128xf32>
    %27 = arith.addf %25, %26 : vector<32x128xf32>
    %28 = arith.mulf %27, %27 : vector<32x128xf32>
    %cst_5 = arith.constant dense<0.000000e+00> : vector<128xf32>
    %29 = vector.multi_reduction <add>, %28, %cst_5 [0] : vector<32x128xf32> to vector<128xf32>
    %30 = vector.shape_cast %29 : vector<128xf32> to vector<1x128xf32>
    %31 = math.sqrt %30 : vector<1x128xf32>
    %32 = vector.extract_strided_slice %1 {offsets = [2, 0], sizes = [1, 128], strides = [1, 1]} : vector<8x128xi32> to vector<1x128xi32>
    %33 = vector.broadcast %32 : vector<1x128xi32> to vector<128x128xi32>
    %34 = arith.cmpi eq, %8, %33 : vector<128x128xi32>
    %35 = arith.extui %34 : vector<128x128xi1> to vector<128x128xi32>
    %36 = arith.sitofp %35 : vector<128x128xi32> to vector<128x128xf32>
    %37 = vector.extract_strided_slice %1 {offsets = [3, 0], sizes = [1, 128], strides = [1, 1]} : vector<8x128xi32> to vector<1x128xi32>
    %38 = vector.broadcast %37 : vector<1x128xi32> to vector<128x128xi32>
    %39 = arith.cmpi eq, %8, %38 : vector<128x128xi32>
    %40 = arith.extui %39 : vector<128x128xi1> to vector<128x128xi32>
    %41 = arith.sitofp %40 : vector<128x128xi32> to vector<128x128xf32>
    %42 = arith.subf %36, %41 : vector<128x128xf32>
    %cst_6 = arith.constant dense<0.000000e+00> : vector<32x128xf32>
    %43 = tpu.matmul %0, %42, %cst_6 {dimension_numbers = #tpu.dot_dimension_numbers<[1], [0], [0], [1], [0, 0, 1, 1], [], []>} : vector<32x128xf32>, vector<128x128xf32>, vector<32x128xf32> -> vector<32x128xf32>
    %44 = vector.broadcast %7 : vector<32x1xf32> to vector<32x128xf32>
    %45 = arith.addf %43, %44 : vector<32x128xf32>
    %46 = arith.mulf %45, %45 : vector<32x128xf32>
    %cst_7 = arith.constant dense<0.000000e+00> : vector<128xf32>
    %47 = vector.multi_reduction <add>, %46, %cst_7 [0] : vector<32x128xf32> to vector<128xf32>
    %48 = vector.shape_cast %47 : vector<128xf32> to vector<1x128xf32>
    %49 = math.sqrt %48 : vector<1x128xf32>
    %50 = vector.extract_strided_slice %1 {offsets = [5, 0], sizes = [1, 128], strides = [1, 1]} : vector<8x128xi32> to vector<1x128xi32>
    %51 = vector.broadcast %50 : vector<1x128xi32> to vector<128x128xi32>
    %52 = arith.cmpi eq, %8, %51 : vector<128x128xi32>
    %53 = arith.extui %52 : vector<128x128xi1> to vector<128x128xi32>
    %54 = arith.sitofp %53 : vector<128x128xi32> to vector<128x128xf32>
    %55 = arith.subf %13, %54 : vector<128x128xf32>
    %cst_8 = arith.constant dense<0.000000e+00> : vector<32x128xf32>
    %56 = tpu.matmul %0, %55, %cst_8 {dimension_numbers = #tpu.dot_dimension_numbers<[1], [0], [0], [1], [0, 0, 1, 1], [], []>} : vector<32x128xf32>, vector<128x128xf32>, vector<32x128xf32> -> vector<32x128xf32>
    %57 = vector.broadcast %7 : vector<32x1xf32> to vector<32x128xf32>
    %58 = arith.addf %56, %57 : vector<32x128xf32>
    %59 = arith.mulf %58, %58 : vector<32x128xf32>
    %cst_9 = arith.constant dense<0.000000e+00> : vector<128xf32>
    %60 = vector.multi_reduction <add>, %59, %cst_9 [0] : vector<32x128xf32> to vector<128xf32>
    %61 = vector.shape_cast %60 : vector<128xf32> to vector<1x128xf32>
    %62 = math.sqrt %61 : vector<1x128xf32>
    %63 = vector.extract_strided_slice %1 {offsets = [6, 0], sizes = [1, 128], strides = [1, 1]} : vector<8x128xi32> to vector<1x128xi32>
    %64 = vector.broadcast %63 : vector<1x128xi32> to vector<128x128xi32>
    %65 = arith.cmpi eq, %8, %64 : vector<128x128xi32>
    %66 = arith.extui %65 : vector<128x128xi1> to vector<128x128xi32>
    %67 = arith.sitofp %66 : vector<128x128xi32> to vector<128x128xf32>
    %68 = arith.subf %13, %67 : vector<128x128xf32>
    %cst_10 = arith.constant dense<0.000000e+00> : vector<32x128xf32>
    %69 = tpu.matmul %0, %68, %cst_10 {dimension_numbers = #tpu.dot_dimension_numbers<[1], [0], [0], [1], [0, 0, 1, 1], [], []>} : vector<32x128xf32>, vector<128x128xf32>, vector<32x128xf32> -> vector<32x128xf32>
    %70 = vector.broadcast %7 : vector<32x1xf32> to vector<32x128xf32>
    %71 = arith.addf %69, %70 : vector<32x128xf32>
    %72 = arith.mulf %71, %71 : vector<32x128xf32>
    %cst_11 = arith.constant dense<0.000000e+00> : vector<128xf32>
    %73 = vector.multi_reduction <add>, %72, %cst_11 [0] : vector<32x128xf32> to vector<128xf32>
    %74 = vector.shape_cast %73 : vector<128xf32> to vector<1x128xf32>
    %75 = math.sqrt %74 : vector<1x128xf32>
    %cst_12 = arith.constant 1.000000e+00 : f32
    %76 = vector.broadcast %cst_12 : f32 to vector<1x128xf32>
    %77 = arith.subf %76, %49 : vector<1x128xf32>
    %cst_13 = arith.constant 0.000000e+00 : f32
    %78 = vector.broadcast %cst_13 : f32 to vector<1x128xf32>
    %79 = arith.maximumf %77, %78 : vector<1x128xf32>
    %80 = arith.subf %62, %75 : vector<1x128xf32>
    %cst_14 = arith.constant 5.000000e-01 : f32
    %81 = vector.broadcast %cst_14 : f32 to vector<1x128xf32>
    %82 = arith.addf %80, %81 : vector<1x128xf32>
    %cst_15 = arith.constant 0.000000e+00 : f32
    %83 = vector.broadcast %cst_15 : f32 to vector<1x128xf32>
    %84 = arith.maximumf %82, %83 : vector<1x128xf32>
    %cst_16 = arith.constant 0.000000e+00 : f32
    %85 = vector.broadcast %cst_16 : f32 to vector<1x128xf32>
    %86 = tpu.concatenate %31, %49, %79, %62, %75, %84, %85, %85 in 0 : vector<1x128xf32>, vector<1x128xf32>, vector<1x128xf32>, vector<1x128xf32>, vector<1x128xf32>, vector<1x128xf32>, vector<1x128xf32>, vector<1x128xf32> -> vector<8x128xf32>
    %c0_17 = arith.constant 0 : index
    %c0_18 = arith.constant 0 : index
    %87 = vector.load %arg3[%c0_17, %c0_18] : memref<8x128xf32, #tpu.memory_space<vmem>>, vector<8x128xf32>
    tpu.vector_store %arg3[%c0_17, %c0_18], %86 {strides = array<i32>} : memref<8x128xf32, #tpu.memory_space<vmem>>, vector<8x128xf32>,
    return
  }
  func.func @transform_0(%arg0: i32) -> (i32, i32) {
    %c0_i32 = arith.constant 0 : i32
    %c0_i32_0 = arith.constant 0 : i32
    %c0_i32_1 = arith.constant 0 : i32
    return %c0_i32, %c0_i32_0 : i32, i32
  }
  func.func @transform_1(%arg0: i32) -> (i32, i32) {
    %c0_i32 = arith.constant 0 : i32
    %c0_i32_0 = arith.constant 0 : i32
    return %c0_i32, %arg0 : i32, i32
  }
  func.func @transform_2(%arg0: i32) -> (i32, i32) {
    %c0_i32 = arith.constant 0 : i32
    %c0_i32_0 = arith.constant 0 : i32
    return %c0_i32, %arg0 : i32, i32
  }
}

</mosaic_0001>

<llo_original>
// kernel: tpu_custom_call.1
$region0: #{tpu_custom_call.1}
  #allocation0 [shape = 'u32[]', space=smem, size = 0x4, offset = 0x4, fixed_abs, tag = 'smem constant byte address 0x4 - core index']
  #allocation1 [shape = 'u32[144,128]{1,0:T(1,128)}', space=vmem, size = 0x12000, scoped, tag = 'internal scratch']
  %s0 = inlined_call_operand.hbm [shape: f32[32,128], index: 0, kind: input, shape index: {}]
  %s1 = inlined_call_operand.hbm [shape: s32[8,128], index: 1, kind: input, shape index: {}]
  %s2 = inlined_call_operand.hbm [shape: f32[8,128], index: 2, kind: output, shape index: {}]
  %s3 = sld [smem:[#allocation0]]
  $region26: #{tpu_custom_call.1} parent=0
    _
  %s5 = ssub.s32 1, %s3
  %s6 = scalar_select 0, %s5, %s3
  $region1: #{tpu_custom_call.1} parent=0
    #allocation2 [shape = 'u8[16384]{0}', space=vmem, size = 0x4000, scoped, tag = 'input window, operand 0, single buffered']
    #allocation3 [shape = 's32[1]{0}', space=sflag, size = 0x4, scoped, tag = 'scoped memory for tpu_custom_call.1']
    #allocation4 [shape = 's32[1]{0}', space=sflag, size = 0x4, scoped, tag = 'scoped memory for tpu_custom_call.1']
    #allocation5 [shape = 'u8[4096]{0}', space=vmem, size = 0x1000, scoped, tag = 'input window, operand 1, single buffered']
    #allocation6 [shape = 's32[1]{0}', space=sflag, size = 0x4, scoped, tag = 'scoped memory for tpu_custom_call.1']
    #allocation7 [shape = 'u8[4096]{0}', space=vmem, size = 0x1000, scoped, tag = 'output window, operand 0, single buffered']
    %7 = vsyncpa [#allocation3], 0
    %8 = vsyncpa [#allocation6], 0
    %9 = vsyncpa [#allocation4], 0
    // Predicated region
    $region2: #{tpu_custom_call.1} parent=1 // pred_check
      _
    $region3: #{tpu_custom_call.1} parent=1 // pred_check_branch
      %11 = sbr.rel (0) target = $region5
    $region4: #{tpu_custom_call.1} parent=1 // pred_region
      %s13 = ssub.s32 512, 512
      %14 = vsyncadd [#allocation3], %s13
      %s15 = sshll.u32 [#allocation2], 4
      %s16 = int_to_ptr.vmem [resolvable:$true] %s15
      %21 = dma.hbm_to_vmem [thread:$0]  %s0, 512, %s16, [#allocation3], 128, 128, 8
    $region5: #{tpu_custom_call.1} parent=1 // pred_fallthru
      _
    // Predicated region
    $region6: #{tpu_custom_call.1} parent=1 // pred_check
      _
    $region7: #{tpu_custom_call.1} parent=1 // pred_check_branch
      %23 = sbr.rel (0) target = $region9
    $region8: #{tpu_custom_call.1} parent=1 // pred_region
      %s25 = ssub.s32 128, 128
      %26 = vsyncadd [#allocation6], %s25
      %s28 = sshll.u32 [#allocation5], 4
      %s29 = int_to_ptr.vmem [resolvable:$true] %s28
      %31 = dma.hbm_to_vmem [thread:$0]  %s1, 128, %s29, [#allocation6]
    $region9: #{tpu_custom_call.1} parent=1 // pred_fallthru
      _
    // Predicated region
    $region10: #{tpu_custom_call.1} parent=1 // pred_check
      _
    $region11: #{tpu_custom_call.1} parent=1 // pred_check_branch
      %33 = sbr.rel (0) target = $region13
    $region12: #{tpu_custom_call.1} parent=1 // pred_region
      %34 = dma.done [#allocation3], 512
    $region13: #{tpu_custom_call.1} parent=1 // pred_fallthru
      _
    // Predicated region
    $region14: #{tpu_custom_call.1} parent=1 // pred_check
      _
    $region15: #{tpu_custom_call.1} parent=1 // pred_check_branch
      %36 = sbr.rel (0) target = $region17
    $region16: #{tpu_custom_call.1} parent=1 // pred_region
      %37 = dma.done [#allocation6], 128
    $region17: #{tpu_custom_call.1} parent=1 // pred_fallthru
      _
    %v38 = vld [vmem:[#allocation2] sm:$0xff]
    %v39 = vld [vmem:[#allocation2 + $0x8] sm:$0xff]
    %v40 = vld [vmem:[#allocation2 + $0x10] sm:$0xff]
    %v41 = vld [vmem:[#allocation2 + $0x18] sm:$0xff]
    %v42 = vld [vmem:[#allocation5] sm:$0xff]
    %v43 = vlaneseq
    %v44 = vshrl.u32 %v43, 7
    %v45 = vadd.s32 %v44, 8
    %v46 = vadd.s32 %v44, 16
    %v47 = vadd.s32 %v44, 24
    %vm48 = vcmp.lt.s32.totalorder %v44, 32
    %vm49 = vcmp.lt.s32.totalorder %v45, 32
    %vm50 = vcmp.lt.s32.totalorder %v46, 32
    %vm51 = vcmp.lt.s32.totalorder %v47, 32
    %v52 = vsel %vm48, 1e-12, 0.0
    %v53 = vsel %vm49, 1e-12, 0.0
    %v54 = vsel %vm50, 1e-12, 0.0
    %v55 = vsel %vm51, 1e-12, 0.0
    %v56 = vadd.s32 %v44, 32
    %v57 = vadd.s32 %v44, 40
    %v58 = vadd.s32 %v44, 48
    %v59 = vadd.s32 %v44, 56
    %v60 = vadd.s32 %v44, 64
    %v61 = vadd.s32 %v44, 72
    %v62 = vadd.s32 %v44, 80
    %v63 = vadd.s32 %v44, 88
    %v64 = vadd.s32 %v44, 96
    %v65 = vadd.s32 %v44, 104
    %v66 = vadd.s32 %v44, 112
    %v67 = vadd.s32 %v44, 120
    %v68 = vlaneseq
    %v69 = vshrl.u32 %v68, 7
    %v70 = vsub.s32 4, %v69
    %v71 = vrot.slane %v42, %v70
    %vm72 = vcmp.eq.s32.totalorder %v44, %v71
    %vm73 = vcmp.eq.s32.totalorder %v45, %v71
    %vm74 = vcmp.eq.s32.totalorder %v46, %v71
    %vm75 = vcmp.eq.s32.totalorder %v47, %v71
    %vm76 = vcmp.eq.s32.totalorder %v56, %v71
    %vm77 = vcmp.eq.s32.totalorder %v57, %v71
    %vm78 = vcmp.eq.s32.totalorder %v58, %v71
    %vm79 = vcmp.eq.s32.totalorder %v59, %v71
    %vm80 = vcmp.eq.s32.totalorder %v60, %v71
    %vm81 = vcmp.eq.s32.totalorder %v61, %v71
    %vm82 = vcmp.eq.s32.totalorder %v62, %v71
    %vm83 = vcmp.eq.s32.totalorder %v63, %v71
    %vm84 = vcmp.eq.s32.totalorder %v64, %v71
    %vm85 = vcmp.eq.s32.totalorder %v65, %v71
    %vm86 = vcmp.eq.s32.totalorder %v66, %v71
    %vm87 = vcmp.eq.s32.totalorder %v67, %v71
    %v88 = vsel %vm72, 1, 0
    %v89 = vsel %vm73, 1, 0
    %v90 = vsel %vm74, 1, 0
    %v91 = vsel %vm75, 1, 0
    %v92 = vsel %vm76, 1, 0
    %v93 = vsel %vm77, 1, 0
    %v94 = vsel %vm78, 1, 0
    %v95 = vsel %vm79, 1, 0
    %v96 = vsel %vm80, 1, 0
    %v97 = vsel %vm81, 1, 0
    %v98 = vsel %vm82, 1, 0
    %v99 = vsel %vm83, 1, 0
    %v100 = vsel %vm84, 1, 0
    %v101 = vsel %vm85, 1, 0
    %v102 = vsel %vm86, 1, 0
    %v103 = vsel %vm87, 1, 0
    %v104 = vcvt.s32.f32 %v88
    %v105 = vcvt.s32.f32 %v89
    %v106 = vcvt.s32.f32 %v90
    %v107 = vcvt.s32.f32 %v91
    %v108 = vcvt.s32.f32 %v92
    %v109 = vcvt.s32.f32 %v93
    %v110 = vcvt.s32.f32 %v94
    %v111 = vcvt.s32.f32 %v95
    %v112 = vcvt.s32.f32 %v96
    %v113 = vcvt.s32.f32 %v97
    %v114 = vcvt.s32.f32 %v98
    %v115 = vcvt.s32.f32 %v99
    %v116 = vcvt.s32.f32 %v100
    %v117 = vcvt.s32.f32 %v101
    %v118 = vcvt.s32.f32 %v102
    %v119 = vcvt.s32.f32 %v103
    %v120 = vlaneseq
    %v121 = vshrl.u32 %v120, 7
    %v122 = vsub.s32 0, %v121
    %v123 = vrot.slane %v42, %v122
    %vm124 = vcmp.eq.s32.totalorder %v44, %v123
    %vm125 = vcmp.eq.s32.totalorder %v45, %v123
    %vm126 = vcmp.eq.s32.totalorder %v46, %v123
    %vm127 = vcmp.eq.s32.totalorder %v47, %v123
    %vm128 = vcmp.eq.s32.totalorder %v56, %v123
    %vm129 = vcmp.eq.s32.totalorder %v57, %v123
    %vm130 = vcmp.eq.s32.totalorder %v58, %v123
    %vm131 = vcmp.eq.s32.totalorder %v59, %v123
    %vm132 = vcmp.eq.s32.totalorder %v60, %v123
    %vm133 = vcmp.eq.s32.totalorder %v61, %v123
    %vm134 = vcmp.eq.s32.totalorder %v62, %v123
    %vm135 = vcmp.eq.s32.totalorder %v63, %v123
    %vm136 = vcmp.eq.s32.totalorder %v64, %v123
    %vm137 = vcmp.eq.s32.totalorder %v65, %v123
    %vm138 = vcmp.eq.s32.totalorder %v66, %v123
    %vm139 = vcmp.eq.s32.totalorder %v67, %v123
    %v140 = vsel %vm124, 1, 0
    %v141 = vsel %vm125, 1, 0
    %v142 = vsel %vm126, 1, 0
    %v143 = vsel %vm127, 1, 0
    %v144 = vsel %vm128, 1, 0
    %v145 = vsel %vm129, 1, 0
    %v146 = vsel %vm130, 1, 0
    %v147 = vsel %vm131, 1, 0
    %v148 = vsel %vm132, 1, 0
    %v149 = vsel %vm133, 1, 0
    %v150 = vsel %vm134, 1, 0
    %v151 = vsel %vm135, 1, 0
    %v152 = vsel %vm136, 1, 0
    %v153 = vsel %vm137, 1, 0
    %v154 = vsel %vm138, 1, 0
    %v155 = vsel %vm139, 1, 0
    %v156 = vcvt.s32.f32 %v140
    %v157 = vcvt.s32.f32 %v141
    %v158 = vcvt.s32.f32 %v142
    %v159 = vcvt.s32.f32 %v143
    %v160 = vcvt.s32.f32 %v144
    %v161 = vcvt.s32.f32 %v145
    %v162 = vcvt.s32.f32 %v146
    %v163 = vcvt.s32.f32 %v147
    %v164 = vcvt.s32.f32 %v148
    %v165 = vcvt.s32.f32 %v149
    %v166 = vcvt.s32.f32 %v150
    %v167 = vcvt.s32.f32 %v151
    %v168 = vcvt.s32.f32 %v152
    %v169 = vcvt.s32.f32 %v153
    %v170 = vcvt.s32.f32 %v154
    %v171 = vcvt.s32.f32 %v155
    %v172 = vlaneseq
    %v173 = vshrl.u32 %v172, 7
    %v174 = vsub.s32 1, %v173
    %v175 = vrot.slane %v42, %v174
    %vm176 = vcmp.eq.s32.totalorder %v44, %v175
    %vm177 = vcmp.eq.s32.totalorder %v45, %v175
    %vm178 = vcmp.eq.s32.totalorder %v46, %v175
    %vm179 = vcmp.eq.s32.totalorder %v47, %v175
    %vm180 = vcmp.eq.s32.totalorder %v56, %v175
    %vm181 = vcmp.eq.s32.totalorder %v57, %v175
    %vm182 = vcmp.eq.s32.totalorder %v58, %v175
    %vm183 = vcmp.eq.s32.totalorder %v59, %v175
    %vm184 = vcmp.eq.s32.totalorder %v60, %v175
    %vm185 = vcmp.eq.s32.totalorder %v61, %v175
    %vm186 = vcmp.eq.s32.totalorder %v62, %v175
    %vm187 = vcmp.eq.s32.totalorder %v63, %v175
    %vm188 = vcmp.eq.s32.totalorder %v64, %v175
    %vm189 = vcmp.eq.s32.totalorder %v65, %v175
    %vm190 = vcmp.eq.s32.totalorder %v66, %v175
    %vm191 = vcmp.eq.s32.totalorder %v67, %v175
    %v192 = vsel %vm176, 1, 0
    %v193 = vsel %vm177, 1, 0
    %v194 = vsel %vm178, 1, 0
    %v195 = vsel %vm179, 1, 0
    %v196 = vsel %vm180, 1, 0
    %v197 = vsel %vm181, 1, 0
    %v198 = vsel %vm182, 1, 0
    %v199 = vsel %vm183, 1, 0
    %v200 = vsel %vm184, 1, 0
    %v201 = vsel %vm185, 1, 0
    %v202 = vsel %vm186, 1, 0
    %v203 = vsel %vm187, 1, 0
    %v204 = vsel %vm188, 1, 0
    %v205 = vsel %vm189, 1, 0
    %v206 = vsel %vm190, 1, 0
    %v207 = vsel %vm191, 1, 0
    %v208 = vcvt.s32.f32 %v192
    %v209 = vcvt.s32.f32 %v193
    %v210 = vcvt.s32.f32 %v194
    %v211 = vcvt.s32.f32 %v195
    %v212 = vcvt.s32.f32 %v196
    %v213 = vcvt.s32.f32 %v197
    %v214 = vcvt.s32.f32 %v198
    %v215 = vcvt.s32.f32 %v199
    %v216 = vcvt.s32.f32 %v200
    %v217 = vcvt.s32.f32 %v201
    %v218 = vcvt.s32.f32 %v202
    %v219 = vcvt.s32.f32 %v203
    %v220 = vcvt.s32.f32 %v204
    %v221 = vcvt.s32.f32 %v205
    %v222 = vcvt.s32.f32 %v206
    %v223 = vcvt.s32.f32 %v207
    %v224 = vsub.f32 %v156, %v208
    %v225 = vsub.f32 %v157, %v209
    %v226 = vsub.f32 %v158, %v210
    %v227 = vsub.f32 %v159, %v211
    %v228 = vsub.f32 %v160, %v212
    %v229 = vsub.f32 %v161, %v213
    %v230 = vsub.f32 %v162, %v214
    %v231 = vsub.f32 %v163, %v215
    %v232 = vsub.f32 %v164, %v216
    %v233 = vsub.f32 %v165, %v217
    %v234 = vsub.f32 %v166, %v218
    %v235 = vsub.f32 %v167, %v219
    %v236 = vsub.f32 %v168, %v220
    %v237 = vsub.f32 %v169, %v221
    %v238 = vsub.f32 %v170, %v222
    %v239 = vsub.f32 %v171, %v223
    %240 = vmatprep.subr.mxu0 0.0
    %241 = vmatpush1.msra.mxu0 %v224
    %242 = vmatprep.subr.mxu0 0.0
    %243 = vmatpush1.msra.mxu0 %v225
    %244 = vmatprep.subr.mxu0 0.0
    %245 = vmatpush1.msra.mxu0 %v226
    %246 = vmatprep.subr.mxu0 0.0
    %247 = vmatpush1.msra.mxu0 %v227
    %248 = vmatprep.subr.mxu0 0.0
    %249 = vmatpush1.msra.mxu0 %v228
    %250 = vmatprep.subr.mxu0 0.0
    %251 = vmatpush1.msra.mxu0 %v229
    %252 = vmatprep.subr.mxu0 0.0
    %253 = vmatpush1.msra.mxu0 %v230
    %254 = vmatprep.subr.mxu0 0.0
    %255 = vmatpush1.msra.mxu0 %v231
    %256 = vmatprep.subr.mxu0 0.0
    %257 = vmatpush1.msra.mxu0 %v232
    %258 = vmatprep.subr.mxu0 0.0
    %259 = vmatpush1.msra.mxu0 %v233
    %260 = vmatprep.subr.mxu0 0.0
    %261 = vmatpush1.msra.mxu0 %v234
    %262 = vmatprep.subr.mxu0 0.0
    %263 = vmatpush1.msra.mxu0 %v235
    %264 = vmatprep.subr.mxu0 0.0
    %265 = vmatpush1.msra.mxu0 %v236
    %266 = vmatprep.subr.mxu0 0.0
    %267 = vmatpush1.msra.mxu0 %v237
    %268 = vmatprep.subr.mxu0 0.0
    %269 = vmatpush1.msra.mxu0 %v238
    %270 = vmatprep.subr.mxu0 0.0
    %271 = vmatpush1.msra.mxu0 %v239
    %272 = vmatprep.subr.mxu0 0.0
    %273 = vmatpush1.msra.mxu0 0.0
    %274 = vmatprep.subr.mxu0 0.0
    %275 = vmatpush1.msra.mxu0 0.0
    %276 = vmatprep.subr.mxu0 0.0
    %277 = vmatpush1.msra.mxu0 0.0
    %278 = vmatprep.subr.mxu0 0.0
    %279 = vmatpush1.msra.mxu0 0.0
    %280 = vmatprep.subr.mxu0 0.0
    %281 = vmatpush1.msra.mxu0 0.0
    %282 = vmatprep.subr.mxu0 0.0
    %283 = vmatpush1.msra.mxu0 0.0
    %284 = vmatprep.subr.mxu0 0.0
    %285 = vmatpush1.msra.mxu0 0.0
    %286 = vmatprep.subr.mxu0 0.0
    %287 = vmatpush1.msra.mxu0 0.0
    %288 = vmatprep.subr.mxu0 0.0
    %289 = vmatpush1.msra.mxu0 0.0
    %290 = vmatprep.subr.mxu0 0.0
    %291 = vmatpush1.msra.mxu0 0.0
    %292 = vmatprep.subr.mxu0 0.0
    %293 = vmatpush1.msra.mxu0 0.0
    %294 = vmatprep.subr.mxu0 0.0
    %295 = vmatpush1.msra.mxu0 0.0
    %296 = vmatprep.subr.mxu0 0.0
    %297 = vmatpush1.msra.mxu0 0.0
    %298 = vmatprep.subr.mxu0 0.0
    %299 = vmatpush1.msra.mxu0 0.0
    %300 = vmatprep.subr.mxu0 0.0
    %301 = vmatpush1.msra.mxu0 0.0
    %302 = vmatprep.subr.mxu0 0.0
    %303 = vmatpush1.msra.mxu0 0.0
    %304 = vmatprep.mubr.f32.mxu0 0.0
    %305 = vmatmul.mubr.f32.gmra.mrb[0].mxu0 %v38
    %v306 = vpop.f32.mrb[0].mxu0
    %v307 = vadd.f32 %v52, %v306
    %v308 = vpop.f32.mrb[0].mxu0
    %309 = vmatprep.mubr.f32.mxu0 0.0
    %310 = vmatmul.mubr.f32.gmra.mrb[0].mxu0 %v39
    %v311 = vpop.f32.mrb[0].mxu0
    %v312 = vadd.f32 %v53, %v311
    %v313 = vpop.f32.mrb[0].mxu0
    %314 = vmatprep.mubr.f32.mxu0 0.0
    %315 = vmatmul.mubr.f32.gmra.mrb[0].mxu0 %v40
    %v316 = vpop.f32.mrb[0].mxu0
    %v317 = vadd.f32 %v54, %v316
    %v318 = vpop.f32.mrb[0].mxu0
    %319 = vmatprep.mubr.f32.mxu0 0.0
    %320 = vmatmul.mubr.f32.gmra.mrb[0].mxu0 %v41
    %v321 = vpop.f32.mrb[0].mxu0
    %v322 = vadd.f32 %v55, %v321
    %v323 = vpop.f32.mrb[0].mxu0
    %324 = vdwg.mxu0
    %v325 = vmul.f32 %v307, %v307
    %v326 = vmul.f32 %v312, %v312
    %v327 = vmul.f32 %v317, %v317
    %v328 = vmul.f32 %v322, %v322
    %v329 = vadd.f32 %v325, %v326
    %v330 = vadd.f32 %v329, %v327
    %v331 = vadd.f32 %v330, %v328
    %v332 = vrot.slane %v331, 4
    %v333 = vadd.f32 %v331, %v332
    %v334 = vrot.slane %v333, 2
    %v335 = vadd.f32 %v333, %v334
    %v336 = vrot.slane %v335, 1
    %v337 = vadd.f32 %v335, %v336
    %v338 = vrsqrt.pop %v337
    %v339 = vmul.f32 %v337, %v338
    %vm340 = vcmp.eq.f32.partialorder %v337, inf
    %v341 = vsel %vm340, %v337, %v339
    %vm342 = vcmp.eq.f32.partialorder %v337, 0.0
    %v343 = vand.u32 %v337, 2147483648
    %v344 = vsel %vm342, %v343, %v341
    %v345 = vlaneseq
    %v346 = vshrl.u32 %v345, 7
    %v347 = vsub.s32 2, %v346
    %v348 = vrot.slane %v42, %v347
    %vm349 = vcmp.eq.s32.totalorder %v44, %v348
    %vm350 = vcmp.eq.s32.totalorder %v45, %v348
    %vm351 = vcmp.eq.s32.totalorder %v46, %v348
    %vm352 = vcmp.eq.s32.totalorder %v47, %v348
    %vm353 = vcmp.eq.s32.totalorder %v56, %v348
    %vm354 = vcmp.eq.s32.totalorder %v57, %v348
    %vm355 = vcmp.eq.s32.totalorder %v58, %v348
    %vm356 = vcmp.eq.s32.totalorder %v59, %v348
    %vm357 = vcmp.eq.s32.totalorder %v60, %v348
    %vm358 = vcmp.eq.s32.totalorder %v61, %v348
    %vm359 = vcmp.eq.s32.totalorder %v62, %v348
    %vm360 = vcmp.eq.s32.totalorder %v63, %v348
    %vm361 = vcmp.eq.s32.totalorder %v64, %v348
    %vm362 = vcmp.eq.s32.totalorder %v65, %v348
    %vm363 = vcmp.eq.s32.totalorder %v66, %v348
    %vm364 = vcmp.eq.s32.totalorder %v67, %v348
    %v365 = vsel %vm349, 1, 0
    %v366 = vsel %vm350, 1, 0
    %v367 = vsel %vm351, 1, 0
    %v368 = vsel %vm352, 1, 0
    %v369 = vsel %vm353, 1, 0
    %v370 = vsel %vm354, 1, 0
    %v371 = vsel %vm355, 1, 0
    %v372 = vsel %vm356, 1, 0
    %v373 = vsel %vm357, 1, 0
    %v374 = vsel %vm358, 1, 0
    %v375 = vsel %vm359, 1, 0
    %v376 = vsel %vm360, 1, 0
    %v377 = vsel %vm361, 1, 0
    %v378 = vsel %vm362, 1, 0
    %v379 = vsel %vm363, 1, 0
    %v380 = vsel %vm364, 1, 0
    %v381 = vcvt.s32.f32 %v365
    %v382 = vcvt.s32.f32 %v366
    %v383 = vcvt.s32.f32 %v367
    %v384 = vcvt.s32.f32 %v368
    %v385 = vcvt.s32.f32 %v369
    %v386 = vcvt.s32.f32 %v370
    %v387 = vcvt.s32.f32 %v371
    %v388 = vcvt.s32.f32 %v372
    %v389 = vcvt.s32.f32 %v373
    %v390 = vcvt.s32.f32 %v374
    %v391 = vcvt.s32.f32 %v375
    %v392 = vcvt.s32.f32 %v376
    %v393 = vcvt.s32.f32 %v377
    %v394 = vcvt.s32.f32 %v378
    %v395 = vcvt.s32.f32 %v379
    %v396 = vcvt.s32.f32 %v380
    %v397 = vlaneseq
    %v398 = vshrl.u32 %v397, 7
    %v399 = vsub.s32 3, %v398
    %v400 = vrot.slane %v42, %v399
    %vm401 = vcmp.eq.s32.totalorder %v44, %v400
    %vm402 = vcmp.eq.s32.totalorder %v45, %v400
    %vm403 = vcmp.eq.s32.totalorder %v46, %v400
    %vm404 = vcmp.eq.s32.totalorder %v47, %v400
    %vm405 = vcmp.eq.s32.totalorder %v56, %v400
    %vm406 = vcmp.eq.s32.totalorder %v57, %v400
    %vm407 = vcmp.eq.s32.totalorder %v58, %v400
    %vm408 = vcmp.eq.s32.totalorder %v59, %v400
    %vm409 = vcmp.eq.s32.totalorder %v60, %v400
    %vm410 = vcmp.eq.s32.totalorder %v61, %v400
    %vm411 = vcmp.eq.s32.totalorder %v62, %v400
    %vm412 = vcmp.eq.s32.totalorder %v63, %v400
    %vm413 = vcmp.eq.s32.totalorder %v64, %v400
    %vm414 = vcmp.eq.s32.totalorder %v65, %v400
    %vm415 = vcmp.eq.s32.totalorder %v66, %v400
    %vm416 = vcmp.eq.s32.totalorder %v67, %v400
    %v417 = vsel %vm401, 1, 0
    %v418 = vsel %vm402, 1, 0
    %v419 = vsel %vm403, 1, 0
    %v420 = vsel %vm404, 1, 0
    %v421 = vsel %vm405, 1, 0
    %v422 = vsel %vm406, 1, 0
    %v423 = vsel %vm407, 1, 0
    %v424 = vsel %vm408, 1, 0
    %v425 = vsel %vm409, 1, 0
    %v426 = vsel %vm410, 1, 0
    %v427 = vsel %vm411, 1, 0
    %v428 = vsel %vm412, 1, 0
    %v429 = vsel %vm413, 1, 0
    %v430 = vsel %vm414, 1, 0
    %v431 = vsel %vm415, 1, 0
    %v432 = vsel %vm416, 1, 0
    %v433 = vcvt.s32.f32 %v417
    %v434 = vcvt.s32.f32 %v418
    %v435 = vcvt.s32.f32 %v419
    %v436 = vcvt.s32.f32 %v420
    %v437 = vcvt.s32.f32 %v421
    %v438 = vcvt.s32.f32 %v422
    %v439 = vcvt.s32.f32 %v423
    %v440 = vcvt.s32.f32 %v424
    %v441 = vcvt.s32.f32 %v425
    %v442 = vcvt.s32.f32 %v426
    %v443 = vcvt.s32.f32 %v427
    %v444 = vcvt.s32.f32 %v428
    %v445 = vcvt.s32.f32 %v429
    %v446 = vcvt.s32.f32 %v430
    %v447 = vcvt.s32.f32 %v431
    %v448 = vcvt.s32.f32 %v432
    %v449 = vsub.f32 %v381, %v433
    %v450 = vsub.f32 %v382, %v434
    %v451 = vsub.f32 %v383, %v435
    %v452 = vsub.f32 %v384, %v436
    %v453 = vsub.f32 %v385, %v437
    %v454 = vsub.f32 %v386, %v438
    %v455 = vsub.f32 %v387, %v439
    %v456 = vsub.f32 %v388, %v440
    %v457 = vsub.f32 %v389, %v441
    %v458 = vsub.f32 %v390, %v442
    %v459 = vsub.f32 %v391, %v443
    %v460 = vsub.f32 %v392, %v444
    %v461 = vsub.f32 %v393, %v445
    %v462 = vsub.f32 %v394, %v446
    %v463 = vsub.f32 %v395, %v447
    %v464 = vsub.f32 %v396, %v448
    %465 = vmatprep.subr.mxu0 0.0
    %466 = vmatpush1.msra.mxu0 %v449
    %467 = vmatprep.subr.mxu0 0.0
    %468 = vmatpush1.msra.mxu0 %v450
    %469 = vmatprep.subr.mxu0 0.0
    %470 = vmatpush1.msra.mxu0 %v451
    %471 = vmatprep.subr.mxu0 0.0
    %472 = vmatpush1.msra.mxu0 %v452
    %473 = vmatprep.subr.mxu0 0.0
    %474 = vmatpush1.msra.mxu0 %v453
    %475 = vmatprep.subr.mxu0 0.0
    %476 = vmatpush1.msra.mxu0 %v454
    %477 = vmatprep.subr.mxu0 0.0
    %478 = vmatpush1.msra.mxu0 %v455
    %479 = vmatprep.subr.mxu0 0.0
    %480 = vmatpush1.msra.mxu0 %v456
    %481 = vmatprep.subr.mxu0 0.0
    %482 = vmatpush1.msra.mxu0 %v457
    %483 = vmatprep.subr.mxu0 0.0
    %484 = vmatpush1.msra.mxu0 %v458
    %485 = vmatprep.subr.mxu0 0.0
    %486 = vmatpush1.msra.mxu0 %v459
    %487 = vmatprep.subr.mxu0 0.0
    %488 = vmatpush1.msra.mxu0 %v460
    %489 = vmatprep.subr.mxu0 0.0
    %490 = vmatpush1.msra.mxu0 %v461
    %491 = vmatprep.subr.mxu0 0.0
    %492 = vmatpush1.msra.mxu0 %v462
    %493 = vmatprep.subr.mxu0 0.0
    %494 = vmatpush1.msra.mxu0 %v463
    %495 = vmatprep.subr.mxu0 0.0
    %496 = vmatpush1.msra.mxu0 %v464
    %497 = vmatprep.subr.mxu0 0.0
    %498 = vmatpush1.msra.mxu0 0.0
    %499 = vmatprep.subr.mxu0 0.0
    %500 = vmatpush1.msra.mxu0 0.0
    %501 = vmatprep.subr.mxu0 0.0
    %502 = vmatpush1.msra.mxu0 0.0
    %503 = vmatprep.subr.mxu0 0.0
    %504 = vmatpush1.msra.mxu0 0.0
    %505 = vmatprep.subr.mxu0 0.0
    %506 = vmatpush1.msra.mxu0 0.0
    %507 = vmatprep.subr.mxu0 0.0
    %508 = vmatpush1.msra.mxu0 0.0
    %509 = vmatprep.subr.mxu0 0.0
    %510 = vmatpush1.msra.mxu0 0.0
    %511 = vmatprep.subr.mxu0 0.0
    %512 = vmatpush1.msra.mxu0 0.0
    %513 = vmatprep.subr.mxu0 0.0
    %514 = vmatpush1.msra.mxu0 0.0
    %515 = vmatprep.subr.mxu0 0.0
    %516 = vmatpush1.msra.mxu0 0.0
    %517 = vmatprep.subr.mxu0 0.0
    %518 = vmatpush1.msra.mxu0 0.0
    %519 = vmatprep.subr.mxu0 0.0
    %520 = vmatpush1.msra.mxu0 0.0
    %521 = vmatprep.subr.mxu0 0.0
    %522 = vmatpush1.msra.mxu0 0.0
    %523 = vmatprep.subr.mxu0 0.0
    %524 = vmatpush1.msra.mxu0 0.0
    %525 = vmatprep.subr.mxu0 0.0
    %526 = vmatpush1.msra.mxu0 0.0
    %527 = vmatprep.subr.mxu0 0.0
    %528 = vmatpush1.msra.mxu0 0.0
    %529 = vmatprep.mubr.f32.mxu0 0.0
    %530 = vmatmul.mubr.f32.gmra.mrb[0].mxu0 %v38
    %v531 = vpop.f32.mrb[0].mxu0
    %v532 = vadd.f32 %v52, %v531
    %v533 = vpop.f32.mrb[0].mxu0
    %534 = vmatprep.mubr.f32.mxu0 0.0
    %535 = vmatmul.mubr.f32.gmra.mrb[0].mxu0 %v39
    %v536 = vpop.f32.mrb[0].mxu0
    %v537 = vadd.f32 %v53, %v536
    %v538 = vpop.f32.mrb[0].mxu0
    %539 = vmatprep.mubr.f32.mxu0 0.0
    %540 = vmatmul.mubr.f32.gmra.mrb[0].mxu0 %v40
    %v541 = vpop.f32.mrb[0].mxu0
    %v542 = vadd.f32 %v54, %v541
    %v543 = vpop.f32.mrb[0].mxu0
    %544 = vmatprep.mubr.f32.mxu0 0.0
    %545 = vmatmul.mubr.f32.gmra.mrb[0].mxu0 %v41
    %v546 = vpop.f32.mrb[0].mxu0
    %v547 = vadd.f32 %v55, %v546
    %v548 = vpop.f32.mrb[0].mxu0
    %549 = vdwg.mxu0
    %v550 = vmul.f32 %v532, %v532
    %v551 = vmul.f32 %v537, %v537
    %v552 = vmul.f32 %v542, %v542
    %v553 = vmul.f32 %v547, %v547
    %v554 = vadd.f32 %v550, %v551
    %v555 = vadd.f32 %v554, %v552
    %v556 = vadd.f32 %v555, %v553
    %v557 = vrot.slane %v556, 4
    %v558 = vadd.f32 %v556, %v557
    %v559 = vrot.slane %v558, 2
    %v560 = vadd.f32 %v558, %v559
    %v561 = vrot.slane %v560, 1
    %v562 = vadd.f32 %v560, %v561
    %v563 = vrsqrt.pop %v562
    %v564 = vmul.f32 %v562, %v563
    %vm565 = vcmp.eq.f32.partialorder %v562, inf
    %v566 = vsel %vm565, %v562, %v564
    %vm567 = vcmp.eq.f32.partialorder %v562, 0.0
    %v568 = vand.u32 %v562, 2147483648
    %v569 = vsel %vm567, %v568, %v566
    %v570 = vlaneseq
    %v571 = vshrl.u32 %v570, 7
    %v572 = vsub.s32 5, %v571
    %v573 = vrot.slane %v42, %v572
    %vm574 = vcmp.eq.s32.totalorder %v44, %v573
    %vm575 = vcmp.eq.s32.totalorder %v45, %v573
    %vm576 = vcmp.eq.s32.totalorder %v46, %v573
    %vm577 = vcmp.eq.s32.totalorder %v47, %v573
    %vm578 = vcmp.eq.s32.totalorder %v56, %v573
    %vm579 = vcmp.eq.s32.totalorder %v57, %v573
    %vm580 = vcmp.eq.s32.totalorder %v58, %v573
    %vm581 = vcmp.eq.s32.totalorder %v59, %v573
    %vm582 = vcmp.eq.s32.totalorder %v60, %v573
    %vm583 = vcmp.eq.s32.totalorder %v61, %v573
    %vm584 = vcmp.eq.s32.totalorder %v62, %v573
    %vm585 = vcmp.eq.s32.totalorder %v63, %v573
    %vm586 = vcmp.eq.s32.totalorder %v64, %v573
    %vm587 = vcmp.eq.s32.totalorder %v65, %v573
    %vm588 = vcmp.eq.s32.totalorder %v66, %v573
    %vm589 = vcmp.eq.s32.totalorder %v67, %v573
    %v590 = vsel %vm574, 1, 0
    %v591 = vsel %vm575, 1, 0
    %v592 = vsel %vm576, 1, 0
    %v593 = vsel %vm577, 1, 0
    %v594 = vsel %vm578, 1, 0
    %v595 = vsel %vm579, 1, 0
    %v596 = vsel %vm580, 1, 0
    %v597 = vsel %vm581, 1, 0
    %v598 = vsel %vm582, 1, 0
    %v599 = vsel %vm583, 1, 0
    %v600 = vsel %vm584, 1, 0
    %v601 = vsel %vm585, 1, 0
    %v602 = vsel %vm586, 1, 0
    %v603 = vsel %vm587, 1, 0
    %v604 = vsel %vm588, 1, 0
    %v605 = vsel %vm589, 1, 0
    %v606 = vcvt.s32.f32 %v590
    %v607 = vcvt.s32.f32 %v591
    %v608 = vcvt.s32.f32 %v592
    %v609 = vcvt.s32.f32 %v593
    %v610 = vcvt.s32.f32 %v594
    %v611 = vcvt.s32.f32 %v595
    %v612 = vcvt.s32.f32 %v596
    %v613 = vcvt.s32.f32 %v597
    %v614 = vcvt.s32.f32 %v598
    %v615 = vcvt.s32.f32 %v599
    %v616 = vcvt.s32.f32 %v600
    %v617 = vcvt.s32.f32 %v601
    %v618 = vcvt.s32.f32 %v602
    %v619 = vcvt.s32.f32 %v603
    %v620 = vcvt.s32.f32 %v604
    %v621 = vcvt.s32.f32 %v605
    %v622 = vsub.f32 %v104, %v606
    %v623 = vsub.f32 %v105, %v607
    %v624 = vsub.f32 %v106, %v608
    %v625 = vsub.f32 %v107, %v609
    %v626 = vsub.f32 %v108, %v610
    %v627 = vsub.f32 %v109, %v611
    %v628 = vsub.f32 %v110, %v612
    %v629 = vsub.f32 %v111, %v613
    %v630 = vsub.f32 %v112, %v614
    %v631 = vsub.f32 %v113, %v615
    %v632 = vsub.f32 %v114, %v616
    %v633 = vsub.f32 %v115, %v617
    %v634 = vsub.f32 %v116, %v618
    %v635 = vsub.f32 %v117, %v619
    %v636 = vsub.f32 %v118, %v620
    %v637 = vsub.f32 %v119, %v621
    %638 = vmatprep.subr.mxu0 0.0
    %639 = vmatpush1.msra.mxu0 %v622
    %640 = vmatprep.subr.mxu0 0.0
    %641 = vmatpush1.msra.mxu0 %v623
    %642 = vmatprep.subr.mxu0 0.0
    %643 = vmatpush1.msra.mxu0 %v624
    %644 = vmatprep.subr.mxu0 0.0
    %645 = vmatpush1.msra.mxu0 %v625
    %646 = vmatprep.subr.mxu0 0.0
    %647 = vmatpush1.msra.mxu0 %v626
    %648 = vmatprep.subr.mxu0 0.0
    %649 = vmatpush1.msra.mxu0 %v627
    %650 = vmatprep.subr.mxu0 0.0
    %651 = vmatpush1.msra.mxu0 %v628
    %652 = vmatprep.subr.mxu0 0.0
    %653 = vmatpush1.msra.mxu0 %v629
    %654 = vmatprep.subr.mxu0 0.0
    %655 = vmatpush1.msra.mxu0 %v630
    %656 = vmatprep.subr.mxu0 0.0
    %657 = vmatpush1.msra.mxu0 %v631
    %658 = vmatprep.subr.mxu0 0.0
    %659 = vmatpush1.msra.mxu0 %v632
    %660 = vmatprep.subr.mxu0 0.0
    %661 = vmatpush1.msra.mxu0 %v633
    %662 = vmatprep.subr.mxu0 0.0
    %663 = vmatpush1.msra.mxu0 %v634
    %664 = vmatprep.subr.mxu0 0.0
    %665 = vmatpush1.msra.mxu0 %v635
    %666 = vmatprep.subr.mxu0 0.0
    %667 = vmatpush1.msra.mxu0 %v636
    %668 = vmatprep.subr.mxu0 0.0
    %669 = vmatpush1.msra.mxu0 %v637
    %670 = vmatprep.subr.mxu0 0.0
    %671 = vmatpush1.msra.mxu0 0.0
    %672 = vmatprep.subr.mxu0 0.0
    %673 = vmatpush1.msra.mxu0 0.0
    %674 = vmatprep.subr.mxu0 0.0
    %675 = vmatpush1.msra.mxu0 0.0
    %676 = vmatprep.subr.mxu0 0.0
    %677 = vmatpush1.msra.mxu0 0.0
    %678 = vmatprep.subr.mxu0 0.0
    %679 = vmatpush1.msra.mxu0 0.0
    %680 = vmatprep.subr.mxu0 0.0
    %681 = vmatpush1.msra.mxu0 0.0
    %682 = vmatprep.subr.mxu0 0.0
    %683 = vmatpush1.msra.mxu0 0.0
    %684 = vmatprep.subr.mxu0 0.0
    %685 = vmatpush1.msra.mxu0 0.0
    %686 = vmatprep.subr.mxu0 0.0
    %687 = vmatpush1.msra.mxu0 0.0
    %688 = vmatprep.subr.mxu0 0.0
    %689 = vmatpush1.msra.mxu0 0.0
    %690 = vmatprep.subr.mxu0 0.0
    %691 = vmatpush1.msra.mxu0 0.0
    %692 = vmatprep.subr.mxu0 0.0
    %693 = vmatpush1.msra.mxu0 0.0
    %694 = vmatprep.subr.mxu0 0.0
    %695 = vmatpush1.msra.mxu0 0.0
    %696 = vmatprep.subr.mxu0 0.0
    %697 = vmatpush1.msra.mxu0 0.0
    %698 = vmatprep.subr.mxu0 0.0
    %699 = vmatpush1.msra.mxu0 0.0
    %700 = vmatprep.subr.mxu0 0.0
    %701 = vmatpush1.msra.mxu0 0.0
    %702 = vmatprep.mubr.f32.mxu0 0.0
    %703 = vmatmul.mubr.f32.gmra.mrb[0].mxu0 %v38
    %v704 = vpop.f32.mrb[0].mxu0
    %v705 = vadd.f32 %v52, %v704
    %v706 = vpop.f32.mrb[0].mxu0
    %707 = vmatprep.mubr.f32.mxu0 0.0
    %708 = vmatmul.mubr.f32.gmra.mrb[0].mxu0 %v39
    %v709 = vpop.f32.mrb[0].mxu0
    %v710 = vadd.f32 %v53, %v709
    %v711 = vpop.f32.mrb[0].mxu0
    %712 = vmatprep.mubr.f32.mxu0 0.0
    %713 = vmatmul.mubr.f32.gmra.mrb[0].mxu0 %v40
    %v714 = vpop.f32.mrb[0].mxu0
    %v715 = vadd.f32 %v54, %v714
    %v716 = vpop.f32.mrb[0].mxu0
    %717 = vmatprep.mubr.f32.mxu0 0.0
    %718 = vmatmul.mubr.f32.gmra.mrb[0].mxu0 %v41
    %v719 = vpop.f32.mrb[0].mxu0
    %v720 = vadd.f32 %v55, %v719
    %v721 = vpop.f32.mrb[0].mxu0
    %722 = vdwg.mxu0
    %v723 = vmul.f32 %v705, %v705
    %v724 = vmul.f32 %v710, %v710
    %v725 = vmul.f32 %v715, %v715
    %v726 = vmul.f32 %v720, %v720
    %v727 = vadd.f32 %v723, %v724
    %v728 = vadd.f32 %v727, %v725
    %v729 = vadd.f32 %v728, %v726
    %v730 = vrot.slane %v729, 4
    %v731 = vadd.f32 %v729, %v730
    %v732 = vrot.slane %v731, 2
    %v733 = vadd.f32 %v731, %v732
    %v734 = vrot.slane %v733, 1
    %v735 = vadd.f32 %v733, %v734
    %v736 = vrsqrt.pop %v735
    %v737 = vmul.f32 %v735, %v736
    %vm738 = vcmp.eq.f32.partialorder %v735, inf
    %v739 = vsel %vm738, %v735, %v737
    %vm740 = vcmp.eq.f32.partialorder %v735, 0.0
    %v741 = vand.u32 %v735, 2147483648
    %v742 = vsel %vm740, %v741, %v739
    %v743 = vlaneseq
    %v744 = vshrl.u32 %v743, 7
    %v745 = vsub.s32 6, %v744
    %v746 = vrot.slane %v42, %v745
    %vm747 = vcmp.eq.s32.totalorder %v44, %v746
    %vm748 = vcmp.eq.s32.totalorder %v45, %v746
    %vm749 = vcmp.eq.s32.totalorder %v46, %v746
    %vm750 = vcmp.eq.s32.totalorder %v47, %v746
    %vm751 = vcmp.eq.s32.totalorder %v56, %v746
    %vm752 = vcmp.eq.s32.totalorder %v57, %v746
    %vm753 = vcmp.eq.s32.totalorder %v58, %v746
    %vm754 = vcmp.eq.s32.totalorder %v59, %v746
    %vm755 = vcmp.eq.s32.totalorder %v60, %v746
    %vm756 = vcmp.eq.s32.totalorder %v61, %v746
    %vm757 = vcmp.eq.s32.totalorder %v62, %v746
    %vm758 = vcmp.eq.s32.totalorder %v63, %v746
    %vm759 = vcmp.eq.s32.totalorder %v64, %v746
    %vm760 = vcmp.eq.s32.totalorder %v65, %v746
    %vm761 = vcmp.eq.s32.totalorder %v66, %v746
    %vm762 = vcmp.eq.s32.totalorder %v67, %v746
    %v763 = vsel %vm747, 1, 0
    %v764 = vsel %vm748, 1, 0
    %v765 = vsel %vm749, 1, 0
    %v766 = vsel %vm750, 1, 0
    %v767 = vsel %vm751, 1, 0
    %v768 = vsel %vm752, 1, 0
    %v769 = vsel %vm753, 1, 0
    %v770 = vsel %vm754, 1, 0
    %v771 = vsel %vm755, 1, 0
    %v772 = vsel %vm756, 1, 0
    %v773 = vsel %vm757, 1, 0
    %v774 = vsel %vm758, 1, 0
    %v775 = vsel %vm759, 1, 0
    %v776 = vsel %vm760, 1, 0
    %v777 = vsel %vm761, 1, 0
    %v778 = vsel %vm762, 1, 0
    %v779 = vcvt.s32.f32 %v763
    %v780 = vcvt.s32.f32 %v764
    %v781 = vcvt.s32.f32 %v765
    %v782 = vcvt.s32.f32 %v766
    %v783 = vcvt.s32.f32 %v767
    %v784 = vcvt.s32.f32 %v768
    %v785 = vcvt.s32.f32 %v769
    %v786 = vcvt.s32.f32 %v770
    %v787 = vcvt.s32.f32 %v771
    %v788 = vcvt.s32.f32 %v772
    %v789 = vcvt.s32.f32 %v773
    %v790 = vcvt.s32.f32 %v774
    %v791 = vcvt.s32.f32 %v775
    %v792 = vcvt.s32.f32 %v776
    %v793 = vcvt.s32.f32 %v777
    %v794 = vcvt.s32.f32 %v778
    %v795 = vsub.f32 %v104, %v779
    %v796 = vsub.f32 %v105, %v780
    %v797 = vsub.f32 %v106, %v781
    %v798 = vsub.f32 %v107, %v782
    %v799 = vsub.f32 %v108, %v783
    %v800 = vsub.f32 %v109, %v784
    %v801 = vsub.f32 %v110, %v785
    %v802 = vsub.f32 %v111, %v786
    %v803 = vsub.f32 %v112, %v787
    %v804 = vsub.f32 %v113, %v788
    %v805 = vsub.f32 %v114, %v789
    %v806 = vsub.f32 %v115, %v790
    %v807 = vsub.f32 %v116, %v791
    %v808 = vsub.f32 %v117, %v792
    %v809 = vsub.f32 %v118, %v793
    %v810 = vsub.f32 %v119, %v794
    %811 = vmatprep.subr.mxu0 0.0
    %812 = vmatpush1.msra.mxu0 %v795
    %813 = vmatprep.subr.mxu0 0.0
    %814 = vmatpush1.msra.mxu0 %v796
    %815 = vmatprep.subr.mxu0 0.0
    %816 = vmatpush1.msra.mxu0 %v797
    %817 = vmatprep.subr.mxu0 0.0
    %818 = vmatpush1.msra.mxu0 %v798
    %819 = vmatprep.subr.mxu0 0.0
    %820 = vmatpush1.msra.mxu0 %v799
    %821 = vmatprep.subr.mxu0 0.0
    %822 = vmatpush1.msra.mxu0 %v800
    %823 = vmatprep.subr.mxu0 0.0
    %824 = vmatpush1.msra.mxu0 %v801
    %825 = vmatprep.subr.mxu0 0.0
    %826 = vmatpush1.msra.mxu0 %v802
    %827 = vmatprep.subr.mxu0 0.0
    %828 = vmatpush1.msra.mxu0 %v803
    %829 = vmatprep.subr.mxu0 0.0
    %830 = vmatpush1.msra.mxu0 %v804
    %831 = vmatprep.subr.mxu0 0.0
    %832 = vmatpush1.msra.mxu0 %v805
    %833 = vmatprep.subr.mxu0 0.0
    %834 = vmatpush1.msra.mxu0 %v806
    %835 = vmatprep.subr.mxu0 0.0
    %836 = vmatpush1.msra.mxu0 %v807
    %837 = vmatprep.subr.mxu0 0.0
    %838 = vmatpush1.msra.mxu0 %v808
    %839 = vmatprep.subr.mxu0 0.0
    %840 = vmatpush1.msra.mxu0 %v809
    %841 = vmatprep.subr.mxu0 0.0
    %842 = vmatpush1.msra.mxu0 %v810
    %843 = vmatprep.subr.mxu0 0.0
    %844 = vmatpush1.msra.mxu0 0.0
    %845 = vmatprep.subr.mxu0 0.0
    %846 = vmatpush1.msra.mxu0 0.0
    %847 = vmatprep.subr.mxu0 0.0
    %848 = vmatpush1.msra.mxu0 0.0
    %849 = vmatprep.subr.mxu0 0.0
    %850 = vmatpush1.msra.mxu0 0.0
    %851 = vmatprep.subr.mxu0 0.0
    %852 = vmatpush1.msra.mxu0 0.0
    %853 = vmatprep.subr.mxu0 0.0
    %854 = vmatpush1.msra.mxu0 0.0
    %855 = vmatprep.subr.mxu0 0.0
    %856 = vmatpush1.msra.mxu0 0.0
    %857 = vmatprep.subr.mxu0 0.0
    %858 = vmatpush1.msra.mxu0 0.0
    %859 = vmatprep.subr.mxu0 0.0
    %860 = vmatpush1.msra.mxu0 0.0
    %861 = vmatprep.subr.mxu0 0.0
    %862 = vmatpush1.msra.mxu0 0.0
    %863 = vmatprep.subr.mxu0 0.0
    %864 = vmatpush1.msra.mxu0 0.0
    %865 = vmatprep.subr.mxu0 0.0
    %866 = vmatpush1.msra.mxu0 0.0
    %867 = vmatprep.subr.mxu0 0.0
    %868 = vmatpush1.msra.mxu0 0.0
    %869 = vmatprep.subr.mxu0 0.0
    %870 = vmatpush1.msra.mxu0 0.0
    %871 = vmatprep.subr.mxu0 0.0
    %872 = vmatpush1.msra.mxu0 0.0
    %873 = vmatprep.subr.mxu0 0.0
    %874 = vmatpush1.msra.mxu0 0.0
    %875 = vmatprep.mubr.f32.mxu0 0.0
    %876 = vmatmul.mubr.f32.gmra.mrb[0].mxu0 %v38
    %v877 = vpop.f32.mrb[0].mxu0
    %v878 = vadd.f32 %v52, %v877
    %v879 = vpop.f32.mrb[0].mxu0
    %880 = vmatprep.mubr.f32.mxu0 0.0
    %881 = vmatmul.mubr.f32.gmra.mrb[0].mxu0 %v39
    %v882 = vpop.f32.mrb[0].mxu0
    %v883 = vadd.f32 %v53, %v882
    %v884 = vpop.f32.mrb[0].mxu0
    %885 = vmatprep.mubr.f32.mxu0 0.0
    %886 = vmatmul.mubr.f32.gmra.mrb[0].mxu0 %v40
    %v887 = vpop.f32.mrb[0].mxu0
    %v888 = vadd.f32 %v54, %v887
    %v889 = vpop.f32.mrb[0].mxu0
    %890 = vmatprep.mubr.f32.mxu0 0.0
    %891 = vmatmul.mubr.f32.gmra.mrb[0].mxu0 %v41
    %v892 = vpop.f32.mrb[0].mxu0
    %v893 = vadd.f32 %v55, %v892
    %v894 = vpop.f32.mrb[0].mxu0
    %895 = vdwg.mxu0
    %v896 = vmul.f32 %v878, %v878
    %v897 = vmul.f32 %v883, %v883
    %v898 = vmul.f32 %v888, %v888
    %v899 = vmul.f32 %v893, %v893
    %v900 = vadd.f32 %v896, %v897
    %v901 = vadd.f32 %v900, %v898
    %v902 = vadd.f32 %v901, %v899
    %v903 = vrot.slane %v902, 4
    %v904 = vadd.f32 %v902, %v903
    %v905 = vrot.slane %v904, 2
    %v906 = vadd.f32 %v904, %v905
    %v907 = vrot.slane %v906, 1
    %v908 = vadd.f32 %v906, %v907
    %v909 = vrsqrt.pop %v908
    %v910 = vmul.f32 %v908, %v909
    %vm911 = vcmp.eq.f32.partialorder %v908, inf
    %v912 = vsel %vm911, %v908, %v910
    %vm913 = vcmp.eq.f32.partialorder %v908, 0.0
    %v914 = vand.u32 %v908, 2147483648
    %v915 = vsel %vm913, %v914, %v912
    %v916 = vsub.f32 1.0, %v569
    %v917 = vmax.f32 %v916, 0.0
    %v918 = vsub.f32 %v742, %v915
    %v919 = vadd.f32 %v918, 0.5
    %v920 = vmax.f32 %v919, 0.0
    %vm921 = vcmask 1040384
    %v922 = vsel %vm921, %v344, %v569
    %vm923 = vcmask 1041408
    %v924 = vsel %vm923, %v922, %v917
    %vm925 = vcmask 1042432
    %v926 = vsel %vm925, %v924, %v742
    %vm927 = vcmask 1043456
    %v928 = vsel %vm927, %v926, %v915
    %vm929 = vcmask 1044480
    %v930 = vsel %vm929, %v928, %v920
    %vm931 = vcmask 1045504
    %v932 = vsel %vm931, %v930, 0.0
    %vm933 = vcmask 1046528
    %v934 = vsel %vm933, %v932, 0.0
    %935 = vst [vmem:[#allocation7] sm:$0xff] %v934
    // Predicated region
    $region18: #{tpu_custom_call.1} parent=1 // pred_check
      _
    $region19: #{tpu_custom_call.1} parent=1 // pred_check_branch
      %937 = sbr.rel (0) target = $region21
    $region20: #{tpu_custom_call.1} parent=1 // pred_region
      %s939 = ssub.s32 128, 128
      %940 = vsyncadd [#allocation4], %s939
      %s942 = sshll.u32 [#allocation7], 4
      %s943 = int_to_ptr.vmem [resolvable:$true] %s942
      %945 = dma.vmem_to_hbm [thread:$0]  %s943, 128, %s2, [#allocation4]
    $region21: #{tpu_custom_call.1} parent=1 // pred_fallthru
      _
    // Predicated region
    $region22: #{tpu_custom_call.1} parent=1 // pred_check
      _
    $region23: #{tpu_custom_call.1} parent=1 // pred_check_branch
      %947 = sbr.rel (0) target = $region25
    $region24: #{tpu_custom_call.1} parent=1 // pred_region
      %948 = dma.done [#allocation4], 128
    $region25: #{tpu_custom_call.1} parent=1 // pred_fallthru
      _
    %949 = vsyncpa [#allocation3], 1
    %950 = vsyncpa [#allocation6], 1
    %951 = vsyncpa [#allocation4], 1

</llo_original>
